<compile_context>
chip_gen: v5e
topology: v5e:2x2
jax: 0.10.0
libtpu: 0.0.40
codegen_flags: <defaults>
</compile_context>

<pallas_src>
import functools

import jax
import jax.numpy as jnp
from jax import lax
from jax.experimental import pallas as pl
from jax.experimental.pallas import tpu as pltpu


def _round_up(x, m):
    return (x + m - 1) // m * m


def _decoder_kernel(feats_ref, weights_ref, table_ref, bias_ref, out_ref,
                    wmat_ref, *, add_bias):
    # feats_ref:   VMEM (TB, K)      int32
    # weights_ref: VMEM (TB, K)      f32
    # table_ref:   VMEM (F_pad, TE)  f32
    # bias_ref:    VMEM (1, TE)      f32
    # out_ref:     VMEM (TB, TE)     f32
    # wmat_ref:    VMEM (TB, F_pad)  f32 scratch (persists across grid steps)

    # Build the scattered-weight matrix once per batch tile (E tile j == 0),
    # reuse it for every E tile of that batch tile.
    @pl.when(pl.program_id(1) == 0)
    def _build_wmat():
        feats = feats_ref[...]                       # (TB, K)
        weights = weights_ref[...]                   # (TB, K)
        TB, K = feats.shape
        F_pad = wmat_ref.shape[1]
        f_iota = lax.broadcasted_iota(jnp.int32, (TB, F_pad), 1)
        acc = jnp.zeros((TB, F_pad), jnp.float32)
        # Static unroll over K: each step is one vreg-wide compare+select+add.
        for k in range(K):
            fk = feats[:, k][:, None]                # (TB, 1) -> lane broadcast
            wk = weights[:, k][:, None]
            acc = acc + jnp.where(f_iota == fk, wk, 0.0)
        wmat_ref[...] = acc

    # Single lane-dense MXU matmul for the whole tile, bias added once.
    acc = jnp.dot(wmat_ref[...], table_ref[...],
                  preferred_element_type=jnp.float32)      # (TB, TE)
    if add_bias:
        acc = acc + bias_ref[...]
    out_ref[...] = acc


def decoder_forward(feats, table, weights, bias, use_bias=True):
    """feats (B,K) int, table (F,E) f32, weights (B,K) f32, bias (E,) f32 -> (B,E) f32."""
    B, K = feats.shape
    F, E = table.shape

    # Tile sizes: sublane-aligned batch tile, lane-dense (>=128) embedding tile.
    TB = 128 if B >= 128 else _round_up(B, 8)
    TE = 256 if E >= 256 else _round_up(E, 128)

    B_pad = _round_up(B, TB)
    E_pad = _round_up(E, TE)
    F_pad = _round_up(F, 8)

    feats_p = jnp.pad(feats.astype(jnp.int32), ((0, B_pad - B), (0, 0)))
    weights_p = jnp.pad(weights.astype(jnp.float32), ((0, B_pad - B), (0, 0)))
    table_p = jnp.pad(table.astype(jnp.float32), ((0, F_pad - F), (0, E_pad - E)))
    bias_p = jnp.pad(bias.astype(jnp.float32).reshape(1, E), ((0, 0), (0, E_pad - E)))

    grid = (B_pad // TB, E_pad // TE)

    # Rough per-step VMEM footprint (double-buffered blocks + scratch) with
    # headroom, kept well under v7x's 64 MiB physical VMEM.
    blk_bytes = 4 * (2 * (2 * TB * K) + 2 * (F_pad * TE) + 2 * TE
                     + 2 * (TB * TE) + TB * F_pad)
    vmem_limit = min(max(4 * blk_bytes, 16 << 20), 48 << 20)

    kernel = functools.partial(_decoder_kernel, add_bias=bool(use_bias))

    out = pl.pallas_call(
        kernel,
        out_shape=jax.ShapeDtypeStruct((B_pad, E_pad), jnp.float32),
        grid=grid,
        in_specs=[
            pl.BlockSpec((TB, K), lambda i, j: (i, 0)),        # feats
            pl.BlockSpec((TB, K), lambda i, j: (i, 0)),        # weights
            pl.BlockSpec((F_pad, TE), lambda i, j: (0, j)),    # embedding table (E tiled)
            pl.BlockSpec((1, TE), lambda i, j: (0, j)),        # bias
        ],
        out_specs=pl.BlockSpec((TB, TE), lambda i, j: (i, j)),
        scratch_shapes=[pltpu.VMEM((TB, F_pad), jnp.float32)],
        compiler_params=pltpu.CompilerParams(
            dimension_semantics=("parallel", "arbitrary"),
            vmem_limit_bytes=vmem_limit,
        ),
    )(feats_p, weights_p, table_p, bias_p)

    return out[:B, :E]


if __name__ == "__main__":
    # Small, deterministic shapes consistent with the module:
    #   embed_size E = 32, num_features F = 16, batch B = 2, K = 8 features/sample.
    E, F, B, K = 32, 16, 2, 8
    key = jax.random.PRNGKey(0)
    k1, k2, k3, k4 = jax.random.split(key, 4)

    # Deterministic "parameters" (Embedding.weight and bias).
    table = jax.random.normal(k1, (F, E), dtype=jnp.float32)
    bias = jax.random.normal(k2, (E,), dtype=jnp.float32)

    # Inputs.
    feats = jax.random.randint(k3, (B, K), 0, F, dtype=jnp.int32)
    weights = jax.random.normal(k4, (B, K), dtype=jnp.float32)

    out = decoder_forward(feats, table, weights, bias, use_bias=True)
    out = jax.block_until_ready(out)

    # Pure-JAX reference for correctness.
    vecs = table[feats]                                   # (B, K, E)
    ref = jnp.einsum("bke,bk->be", vecs, weights) + bias  # (B, E)
    assert out.shape == (B, E)
    assert jnp.allclose(out, ref, atol=1e-4, rtol=1e-4), "mismatch vs reference"

    # Also check the bias=False path (gated at compile time, no wasted add).
    out_nb = jax.block_until_ready(decoder_forward(feats, table, weights, bias, use_bias=False))
    ref_nb = jnp.einsum("bke,bk->be", vecs, weights)
    assert jnp.allclose(out_nb, ref_nb, atol=1e-4, rtol=1e-4), "mismatch vs reference (no bias)"

    print("KERNEL_OK")
</pallas_src>

<mosaic_0001>
module attributes {stable_mosaic.version = 11 : i64} {
  func.func @_decoder_kernel(%arg0: i32, %arg1: i32, %arg2: memref<8x8xi32, #tpu.memory_space<vmem>>, %arg3: memref<8x8xf32, #tpu.memory_space<vmem>>, %arg4: memref<16x128xf32, #tpu.memory_space<vmem>>, %arg5: memref<1x128xf32, #tpu.memory_space<vmem>>, %arg6: memref<8x128xf32, #tpu.memory_space<vmem>>, %arg7: memref<8x16xf32, #tpu.memory_space<vmem>>) attributes {dimension_semantics = [#tpu.dimension_semantics<parallel>, #tpu.dimension_semantics<arbitrary>], iteration_bounds = array<i64: 1, 1>, scalar_prefetch = 0 : i64, scratch_operands = 1 : i64, tpu.core_type = #tpu.core_type<tc>, window_params = [{transform_indices = @transform_0, window_bounds = array<i64: 8, 8>}, {transform_indices = @transform_1, window_bounds = array<i64: 8, 8>}, {transform_indices = @transform_2, window_bounds = array<i64: 16, 128>}, {transform_indices = @transform_3, window_bounds = array<i64: 1, 128>}, {transform_indices = @transform_4, window_bounds = array<i64: 8, 128>}]} {
    %c0_i32 = arith.constant 0 : i32
    %0 = arith.cmpi eq, %arg1, %c0_i32 : i32
    %1 = arith.extui %0 : i1 to i32
    %c0_i32_0 = arith.constant 0 : i32
    %2 = arith.cmpi ne, %1, %c0_i32_0 : i32
    scf.if %2 {
      %c0_8 = arith.constant 0 : index
      %c0_9 = arith.constant 0 : index
      %10 = vector.load %arg2[%c0_8, %c0_9] : memref<8x8xi32, #tpu.memory_space<vmem>>, vector<8x8xi32>
      %c0_10 = arith.constant 0 : index
      %c0_11 = arith.constant 0 : index
      %11 = vector.load %arg3[%c0_10, %c0_11] : memref<8x8xf32, #tpu.memory_space<vmem>>, vector<8x8xf32>
      %12 = tpu.iota {dimensions = array<i32: 1>} : vector<8x16xi32>
      %cst_12 = arith.constant 0.000000e+00 : f32
      %13 = vector.broadcast %cst_12 : f32 to vector<8x16xf32>
      %14 = vector.extract_strided_slice %10 {offsets = [0, 0], sizes = [8, 1], strides = [1, 1]} : vector<8x8xi32> to vector<8x1xi32>
      %15 = vector.shape_cast %14 : vector<8x1xi32> to vector<8xi32>
      %16 = vector.shape_cast %15 : vector<8xi32> to vector<8x1xi32>
      %17 = vector.extract_strided_slice %11 {offsets = [0, 0], sizes = [8, 1], strides = [1, 1]} : vector<8x8xf32> to vector<8x1xf32>
      %18 = vector.shape_cast %17 : vector<8x1xf32> to vector<8xf32>
      %19 = vector.shape_cast %18 : vector<8xf32> to vector<8x1xf32>
      %20 = vector.broadcast %16 : vector<8x1xi32> to vector<8x16xi32>
      %21 = arith.cmpi eq, %12, %20 : vector<8x16xi32>
      %cst_13 = arith.constant 0.000000e+00 : f32
      %22 = vector.shape_cast %19 : vector<8x1xf32> to vector<8x1xf32>
      %23 = vector.broadcast %22 : vector<8x1xf32> to vector<8x16xf32>
      %24 = vector.broadcast %cst_13 : f32 to vector<8x16xf32>
      %25 = arith.select %21, %23, %24 : vector<8x16xi1>, vector<8x16xf32>
      %26 = arith.addf %13, %25 : vector<8x16xf32>
      %27 = vector.extract_strided_slice %10 {offsets = [0, 1], sizes = [8, 1], strides = [1, 1]} : vector<8x8xi32> to vector<8x1xi32>
      %28 = vector.shape_cast %27 : vector<8x1xi32> to vector<8xi32>
      %29 = vector.shape_cast %28 : vector<8xi32> to vector<8x1xi32>
      %30 = vector.extract_strided_slice %11 {offsets = [0, 1], sizes = [8, 1], strides = [1, 1]} : vector<8x8xf32> to vector<8x1xf32>
      %31 = vector.shape_cast %30 : vector<8x1xf32> to vector<8xf32>
      %32 = vector.shape_cast %31 : vector<8xf32> to vector<8x1xf32>
      %33 = vector.broadcast %29 : vector<8x1xi32> to vector<8x16xi32>
      %34 = arith.cmpi eq, %12, %33 : vector<8x16xi32>
      %cst_14 = arith.constant 0.000000e+00 : f32
      %35 = vector.shape_cast %32 : vector<8x1xf32> to vector<8x1xf32>
      %36 = vector.broadcast %35 : vector<8x1xf32> to vector<8x16xf32>
      %37 = vector.broadcast %cst_14 : f32 to vector<8x16xf32>
      %38 = arith.select %34, %36, %37 : vector<8x16xi1>, vector<8x16xf32>
      %39 = arith.addf %26, %38 : vector<8x16xf32>
      %40 = vector.extract_strided_slice %10 {offsets = [0, 2], sizes = [8, 1], strides = [1, 1]} : vector<8x8xi32> to vector<8x1xi32>
      %41 = vector.shape_cast %40 : vector<8x1xi32> to vector<8xi32>
      %42 = vector.shape_cast %41 : vector<8xi32> to vector<8x1xi32>
      %43 = vector.extract_strided_slice %11 {offsets = [0, 2], sizes = [8, 1], strides = [1, 1]} : vector<8x8xf32> to vector<8x1xf32>
      %44 = vector.shape_cast %43 : vector<8x1xf32> to vector<8xf32>
      %45 = vector.shape_cast %44 : vector<8xf32> to vector<8x1xf32>
      %46 = vector.broadcast %42 : vector<8x1xi32> to vector<8x16xi32>
      %47 = arith.cmpi eq, %12, %46 : vector<8x16xi32>
      %cst_15 = arith.constant 0.000000e+00 : f32
      %48 = vector.shape_cast %45 : vector<8x1xf32> to vector<8x1xf32>
      %49 = vector.broadcast %48 : vector<8x1xf32> to vector<8x16xf32>
      %50 = vector.broadcast %cst_15 : f32 to vector<8x16xf32>
      %51 = arith.select %47, %49, %50 : vector<8x16xi1>, vector<8x16xf32>
      %52 = arith.addf %39, %51 : vector<8x16xf32>
      %53 = vector.extract_strided_slice %10 {offsets = [0, 3], sizes = [8, 1], strides = [1, 1]} : vector<8x8xi32> to vector<8x1xi32>
      %54 = vector.shape_cast %53 : vector<8x1xi32> to vector<8xi32>
      %55 = vector.shape_cast %54 : vector<8xi32> to vector<8x1xi32>
      %56 = vector.extract_strided_slice %11 {offsets = [0, 3], sizes = [8, 1], strides = [1, 1]} : vector<8x8xf32> to vector<8x1xf32>
      %57 = vector.shape_cast %56 : vector<8x1xf32> to vector<8xf32>
      %58 = vector.shape_cast %57 : vector<8xf32> to vector<8x1xf32>
      %59 = vector.broadcast %55 : vector<8x1xi32> to vector<8x16xi32>
      %60 = arith.cmpi eq, %12, %59 : vector<8x16xi32>
      %cst_16 = arith.constant 0.000000e+00 : f32
      %61 = vector.shape_cast %58 : vector<8x1xf32> to vector<8x1xf32>
      %62 = vector.broadcast %61 : vector<8x1xf32> to vector<8x16xf32>
      %63 = vector.broadcast %cst_16 : f32 to vector<8x16xf32>
      %64 = arith.select %60, %62, %63 : vector<8x16xi1>, vector<8x16xf32>
      %65 = arith.addf %52, %64 : vector<8x16xf32>
      %66 = vector.extract_strided_slice %10 {offsets = [0, 4], sizes = [8, 1], strides = [1, 1]} : vector<8x8xi32> to vector<8x1xi32>
      %67 = vector.shape_cast %66 : vector<8x1xi32> to vector<8xi32>
      %68 = vector.shape_cast %67 : vector<8xi32> to vector<8x1xi32>
      %69 = vector.extract_strided_slice %11 {offsets = [0, 4], sizes = [8, 1], strides = [1, 1]} : vector<8x8xf32> to vector<8x1xf32>
      %70 = vector.shape_cast %69 : vector<8x1xf32> to vector<8xf32>
      %71 = vector.shape_cast %70 : vector<8xf32> to vector<8x1xf32>
      %72 = vector.broadcast %68 : vector<8x1xi32> to vector<8x16xi32>
      %73 = arith.cmpi eq, %12, %72 : vector<8x16xi32>
      %cst_17 = arith.constant 0.000000e+00 : f32
      %74 = vector.shape_cast %71 : vector<8x1xf32> to vector<8x1xf32>
      %75 = vector.broadcast %74 : vector<8x1xf32> to vector<8x16xf32>
      %76 = vector.broadcast %cst_17 : f32 to vector<8x16xf32>
      %77 = arith.select %73, %75, %76 : vector<8x16xi1>, vector<8x16xf32>
      %78 = arith.addf %65, %77 : vector<8x16xf32>
      %79 = vector.extract_strided_slice %10 {offsets = [0, 5], sizes = [8, 1], strides = [1, 1]} : vector<8x8xi32> to vector<8x1xi32>
      %80 = vector.shape_cast %79 : vector<8x1xi32> to vector<8xi32>
      %81 = vector.shape_cast %80 : vector<8xi32> to vector<8x1xi32>
      %82 = vector.extract_strided_slice %11 {offsets = [0, 5], sizes = [8, 1], strides = [1, 1]} : vector<8x8xf32> to vector<8x1xf32>
      %83 = vector.shape_cast %82 : vector<8x1xf32> to vector<8xf32>
      %84 = vector.shape_cast %83 : vector<8xf32> to vector<8x1xf32>
      %85 = vector.broadcast %81 : vector<8x1xi32> to vector<8x16xi32>
      %86 = arith.cmpi eq, %12, %85 : vector<8x16xi32>
      %cst_18 = arith.constant 0.000000e+00 : f32
      %87 = vector.shape_cast %84 : vector<8x1xf32> to vector<8x1xf32>
      %88 = vector.broadcast %87 : vector<8x1xf32> to vector<8x16xf32>
      %89 = vector.broadcast %cst_18 : f32 to vector<8x16xf32>
      %90 = arith.select %86, %88, %89 : vector<8x16xi1>, vector<8x16xf32>
      %91 = arith.addf %78, %90 : vector<8x16xf32>
      %92 = vector.extract_strided_slice %10 {offsets = [0, 6], sizes = [8, 1], strides = [1, 1]} : vector<8x8xi32> to vector<8x1xi32>
      %93 = vector.shape_cast %92 : vector<8x1xi32> to vector<8xi32>
      %94 = vector.shape_cast %93 : vector<8xi32> to vector<8x1xi32>
      %95 = vector.extract_strided_slice %11 {offsets = [0, 6], sizes = [8, 1], strides = [1, 1]} : vector<8x8xf32> to vector<8x1xf32>
      %96 = vector.shape_cast %95 : vector<8x1xf32> to vector<8xf32>
      %97 = vector.shape_cast %96 : vector<8xf32> to vector<8x1xf32>
      %98 = vector.broadcast %94 : vector<8x1xi32> to vector<8x16xi32>
      %99 = arith.cmpi eq, %12, %98 : vector<8x16xi32>
      %cst_19 = arith.constant 0.000000e+00 : f32
      %100 = vector.shape_cast %97 : vector<8x1xf32> to vector<8x1xf32>
      %101 = vector.broadcast %100 : vector<8x1xf32> to vector<8x16xf32>
      %102 = vector.broadcast %cst_19 : f32 to vector<8x16xf32>
      %103 = arith.select %99, %101, %102 : vector<8x16xi1>, vector<8x16xf32>
      %104 = arith.addf %91, %103 : vector<8x16xf32>
      %105 = vector.extract_strided_slice %10 {offsets = [0, 7], sizes = [8, 1], strides = [1, 1]} : vector<8x8xi32> to vector<8x1xi32>
      %106 = vector.shape_cast %105 : vector<8x1xi32> to vector<8xi32>
      %107 = vector.shape_cast %106 : vector<8xi32> to vector<8x1xi32>
      %108 = vector.extract_strided_slice %11 {offsets = [0, 7], sizes = [8, 1], strides = [1, 1]} : vector<8x8xf32> to vector<8x1xf32>
      %109 = vector.shape_cast %108 : vector<8x1xf32> to vector<8xf32>
      %110 = vector.shape_cast %109 : vector<8xf32> to vector<8x1xf32>
      %111 = vector.broadcast %107 : vector<8x1xi32> to vector<8x16xi32>
      %112 = arith.cmpi eq, %12, %111 : vector<8x16xi32>
      %cst_20 = arith.constant 0.000000e+00 : f32
      %113 = vector.shape_cast %110 : vector<8x1xf32> to vector<8x1xf32>
      %114 = vector.broadcast %113 : vector<8x1xf32> to vector<8x16xf32>
      %115 = vector.broadcast %cst_20 : f32 to vector<8x16xf32>
      %116 = arith.select %112, %114, %115 : vector<8x16xi1>, vector<8x16xf32>
      %117 = arith.addf %104, %116 : vector<8x16xf32>
      %c0_21 = arith.constant 0 : index
      %c0_22 = arith.constant 0 : index
      %118 = vector.load %arg7[%c0_21, %c0_22] : memref<8x16xf32, #tpu.memory_space<vmem>>, vector<8x16xf32>
      tpu.vector_store %arg7[%c0_21, %c0_22], %117 {strides = array<i32>} : memref<8x16xf32, #tpu.memory_space<vmem>>, vector<8x16xf32>,
    } else {
    }
    %c0 = arith.constant 0 : index
    %c0_1 = arith.constant 0 : index
    %3 = vector.load %arg7[%c0, %c0_1] : memref<8x16xf32, #tpu.memory_space<vmem>>, vector<8x16xf32>
    %c0_2 = arith.constant 0 : index
    %c0_3 = arith.constant 0 : index
    %4 = vector.load %arg4[%c0_2, %c0_3] : memref<16x128xf32, #tpu.memory_space<vmem>>, vector<16x128xf32>
    %cst = arith.constant dense<0.000000e+00> : vector<8x128xf32>
    %5 = tpu.matmul %3, %4, %cst {dimension_numbers = #tpu.dot_dimension_numbers<[1], [0], [0], [1], [0, 0, 1, 1], [], []>} : vector<8x16xf32>, vector<16x128xf32>, vector<8x128xf32> -> vector<8x128xf32>
    %c0_4 = arith.constant 0 : index
    %c0_5 = arith.constant 0 : index
    %6 = vector.load %arg5[%c0_4, %c0_5] : memref<1x128xf32, #tpu.memory_space<vmem>>, vector<1x128xf32>
    %7 = vector.broadcast %6 : vector<1x128xf32> to vector<8x128xf32>
    %8 = arith.addf %5, %7 : vector<8x128xf32>
    %c0_6 = arith.constant 0 : index
    %c0_7 = arith.constant 0 : index
    %9 = vector.load %arg6[%c0_6, %c0_7] : memref<8x128xf32, #tpu.memory_space<vmem>>, vector<8x128xf32>
    tpu.vector_store %arg6[%c0_6, %c0_7], %8 {strides = array<i32>} : memref<8x128xf32, #tpu.memory_space<vmem>>, vector<8x128xf32>,
    return
  }
  func.func @transform_0(%arg0: i32, %arg1: i32) -> (i32, i32) {
    %c0_i32 = arith.constant 0 : i32
    %c0_i32_0 = arith.constant 0 : i32
    return %arg0, %c0_i32 : i32, i32
  }
  func.func @transform_1(%arg0: i32, %arg1: i32) -> (i32, i32) {
    %c0_i32 = arith.constant 0 : i32
    %c0_i32_0 = arith.constant 0 : i32
    return %arg0, %c0_i32 : i32, i32
  }
  func.func @transform_2(%arg0: i32, %arg1: i32) -> (i32, i32) {
    %c0_i32 = arith.constant 0 : i32
    %c0_i32_0 = arith.constant 0 : i32
    return %c0_i32, %arg1 : i32, i32
  }
  func.func @transform_3(%arg0: i32, %arg1: i32) -> (i32, i32) {
    %c0_i32 = arith.constant 0 : i32
    %c0_i32_0 = arith.constant 0 : i32
    return %c0_i32, %arg1 : i32, i32
  }
  func.func @transform_4(%arg0: i32, %arg1: i32) -> (i32, i32) {
    %c0_i32 = arith.constant 0 : i32
    return %arg0, %arg1 : i32, i32
  }
}

</mosaic_0001>

<llo_original>
// kernel: tpu_custom_call.1
$region0: #{tpu_custom_call.1}
  #allocation0 [shape = 'u32[]', space=smem, size = 0x4, offset = 0x4, fixed_abs, tag = 'smem constant byte address 0x4 - core index']
  #allocation1 [shape = 'u32[72,128]{1,0:T(1,128)}', space=vmem, size = 0x9000, scoped, tag = 'internal scratch']
  #allocation2 [shape = 'f32[8,16]{1,0:T(8,128)}', space=vmem, size = 0x1000, scoped, tag = 'scratch operand']
  %s0 = inlined_call_operand.hbm [shape: s32[8,8], index: 0, kind: input, shape index: {}]
  %s1 = inlined_call_operand.hbm [shape: f32[8,8], index: 1, kind: input, shape index: {}]
  %s2 = inlined_call_operand.hbm [shape: f32[16,128], index: 2, kind: input, shape index: {}]
  %s3 = inlined_call_operand.vmem [shape: f32[1,128], index: 3, kind: input, shape index: {}]
  %s4 = inlined_call_operand.hbm [shape: f32[8,128], index: 4, kind: output, shape index: {}]
  %s5 = sld [smem:[#allocation0]]
  $region42: #{tpu_custom_call.1} parent=0
    _
  %s7 = ssub.s32 1, %s5
  %s8 = scalar_select 0, %s7, %s5
  $region1: #{tpu_custom_call.1} parent=0
    #allocation3 [shape = 'u8[4096]{0}', space=vmem, size = 0x1000, scoped, tag = 'input window, operand 0, single buffered']
    #allocation4 [shape = 's32[1]{0}', space=sflag, size = 0x4, scoped, tag = 'scoped memory for tpu_custom_call.1']
    #allocation5 [shape = 's32[1]{0}', space=sflag, size = 0x4, scoped, tag = 'scoped memory for tpu_custom_call.1']
    #allocation6 [shape = 'u8[4096]{0}', space=vmem, size = 0x1000, scoped, tag = 'input window, operand 1, single buffered']
    #allocation7 [shape = 's32[1]{0}', space=sflag, size = 0x4, scoped, tag = 'scoped memory for tpu_custom_call.1']
    #allocation8 [shape = 'u8[8192]{0}', space=vmem, size = 0x2000, scoped, tag = 'input window, operand 2, single buffered']
    #allocation9 [shape = 'u8[4096]{0}', space=vmem, size = 0x1000, scoped, tag = 'output window, operand 0, single buffered']
    %9 = vsyncpa [#allocation4], 0
    %10 = vsyncpa [#allocation7], 0
    %11 = vsyncpa [#allocation5], 0
    // Predicated region
    $region2: #{tpu_custom_call.1} parent=1 // pred_check
      _
    $region3: #{tpu_custom_call.1} parent=1 // pred_check_branch
      %13 = sbr.rel (0) target = $region5
    $region4: #{tpu_custom_call.1} parent=1 // pred_region
      %15 = vsyncadd [#allocation4], 0
      %s17 = sshll.u32 %s0, 4
      %s18 = int_to_ptr.hbm [resolvable:$true] %s17
      %s19 = sshll.u32 [#allocation3], 4
      %s20 = int_to_ptr.vmem [resolvable:$true] %s19
      %22 = dma.hbm_to_vmem [thread:$0]  %s18, 128, %s20, [#allocation4]
    $region5: #{tpu_custom_call.1} parent=1 // pred_fallthru
      _
    // Predicated region
    $region6: #{tpu_custom_call.1} parent=1 // pred_check
      _
    $region7: #{tpu_custom_call.1} parent=1 // pred_check_branch
      %24 = sbr.rel (0) target = $region9
    $region8: #{tpu_custom_call.1} parent=1 // pred_region
      %26 = vsyncadd [#allocation7], 0
      %s28 = sshll.u32 %s1, 4
      %s29 = int_to_ptr.hbm [resolvable:$true] %s28
      %s30 = sshll.u32 [#allocation6], 4
      %s31 = int_to_ptr.vmem [resolvable:$true] %s30
      %33 = dma.hbm_to_vmem [thread:$0]  %s29, 128, %s31, [#allocation7]
    $region9: #{tpu_custom_call.1} parent=1 // pred_fallthru
      _
    // Predicated region
    $region10: #{tpu_custom_call.1} parent=1 // pred_check
      _
    $region11: #{tpu_custom_call.1} parent=1 // pred_check_branch
      %35 = sbr.rel (0) target = $region13
    $region12: #{tpu_custom_call.1} parent=1 // pred_region
      %37 = vsyncadd [#allocation7], 0
      %s38 = sshll.u32 %s2, 4
      %s39 = int_to_ptr.hbm [resolvable:$true] %s38
      %s40 = sshll.u32 [#allocation8], 4
      %s41 = int_to_ptr.vmem [resolvable:$true] %s40
      %46 = dma.hbm_to_vmem [thread:$0]  %s39, 256, %s41, [#allocation7], 128, 128, 8
    $region13: #{tpu_custom_call.1} parent=1 // pred_fallthru
      _
    // Predicated region
    $region14: #{tpu_custom_call.1} parent=1 // pred_check
      _
    $region15: #{tpu_custom_call.1} parent=1 // pred_check_branch
      %48 = sbr.rel (0) target = $region17
    $region16: #{tpu_custom_call.1} parent=1 // pred_region
      _
    $region17: #{tpu_custom_call.1} parent=1 // pred_fallthru
      _
    // Predicated region
    $region18: #{tpu_custom_call.1} parent=1 // pred_check
      _
    $region19: #{tpu_custom_call.1} parent=1 // pred_check_branch
      %50 = sbr.rel (0) target = $region21
    $region20: #{tpu_custom_call.1} parent=1 // pred_region
      %52 = dma.done [#allocation4], 128
    $region21: #{tpu_custom_call.1} parent=1 // pred_fallthru
      _
    // Predicated region
    $region22: #{tpu_custom_call.1} parent=1 // pred_check
      _
    $region23: #{tpu_custom_call.1} parent=1 // pred_check_branch
      %54 = sbr.rel (0) target = $region25
    $region24: #{tpu_custom_call.1} parent=1 // pred_region
      %56 = dma.done [#allocation7], 128
    $region25: #{tpu_custom_call.1} parent=1 // pred_fallthru
      _
    // Predicated region
    $region26: #{tpu_custom_call.1} parent=1 // pred_check
      _
    $region27: #{tpu_custom_call.1} parent=1 // pred_check_branch
      %58 = sbr.rel (0) target = $region29
    $region28: #{tpu_custom_call.1} parent=1 // pred_region
      %60 = dma.done [#allocation7], 256
    $region29: #{tpu_custom_call.1} parent=1 // pred_fallthru
      _
    %p61 = scmp.eq.s32.totalorder 0, 0
    // Predicated region
    $region30: #{tpu_custom_call.1} parent=1 // pred_check
      %p62 = pneg %p61
    $region31: #{tpu_custom_call.1} parent=1 // pred_check_branch
      %64 = sbr.rel (%p62) target = $region33
    $region32: #{tpu_custom_call.1} parent=1 // pred_region
      %v65 = vld [vmem:[#allocation3] sm:$0xff]
      %v66 = vld [vmem:[#allocation6] sm:$0xff]
      %v67 = vlaneseq
      %v68 = vand.u32 %v67, 127
      %69 = vset.pattern.permute.xlu0 0
      %70 = vperm.xlu0 %69, %v65
      %v71 = vpop.permute.xlu0 %70
      %vm72 = vcmp.eq.s32.totalorder %v68, %v71
      %74 = vset.pattern.permute.xlu0 0
      %75 = vperm.xlu0 %74, %v66
      %v76 = vpop.permute.xlu0 %75
      %v78 = vsel %vm72, %v76, 0.0
      %v79 = vadd.f32 %v78, 0.0
      %80 = vset.pattern.permute.xlu0 1
      %81 = vperm.xlu0 %80, %v65
      %v82 = vpop.permute.xlu0 %81
      %vm83 = vcmp.eq.s32.totalorder %v68, %v82
      %84 = vset.pattern.permute.xlu0 1
      %85 = vperm.xlu0 %84, %v66
      %v86 = vpop.permute.xlu0 %85
      %v88 = vsel %vm83, %v86, 0.0
      %v89 = vadd.f32 %v79, %v88
      %90 = vset.pattern.permute.xlu0 2
      %91 = vperm.xlu0 %90, %v65
      %v92 = vpop.permute.xlu0 %91
      %vm93 = vcmp.eq.s32.totalorder %v68, %v92
      %94 = vset.pattern.permute.xlu0 2
      %95 = vperm.xlu0 %94, %v66
      %v96 = vpop.permute.xlu0 %95
      %v98 = vsel %vm93, %v96, 0.0
      %v99 = vadd.f32 %v89, %v98
      %100 = vset.pattern.permute.xlu0 3
      %101 = vperm.xlu0 %100, %v65
      %v102 = vpop.permute.xlu0 %101
      %vm103 = vcmp.eq.s32.totalorder %v68, %v102
      %104 = vset.pattern.permute.xlu0 3
      %105 = vperm.xlu0 %104, %v66
      %v106 = vpop.permute.xlu0 %105
      %v108 = vsel %vm103, %v106, 0.0
      %v109 = vadd.f32 %v99, %v108
      %110 = vset.pattern.permute.xlu0 4
      %111 = vperm.xlu0 %110, %v65
      %v112 = vpop.permute.xlu0 %111
      %vm113 = vcmp.eq.s32.totalorder %v68, %v112
      %114 = vset.pattern.permute.xlu0 4
      %115 = vperm.xlu0 %114, %v66
      %v116 = vpop.permute.xlu0 %115
      %v118 = vsel %vm113, %v116, 0.0
      %v119 = vadd.f32 %v109, %v118
      %120 = vset.pattern.permute.xlu0 5
      %121 = vperm.xlu0 %120, %v65
      %v122 = vpop.permute.xlu0 %121
      %vm123 = vcmp.eq.s32.totalorder %v68, %v122
      %124 = vset.pattern.permute.xlu0 5
      %125 = vperm.xlu0 %124, %v66
      %v126 = vpop.permute.xlu0 %125
      %v128 = vsel %vm123, %v126, 0.0
      %v129 = vadd.f32 %v119, %v128
      %130 = vset.pattern.permute.xlu0 6
      %131 = vperm.xlu0 %130, %v65
      %v132 = vpop.permute.xlu0 %131
      %vm133 = vcmp.eq.s32.totalorder %v68, %v132
      %134 = vset.pattern.permute.xlu0 6
      %135 = vperm.xlu0 %134, %v66
      %v136 = vpop.permute.xlu0 %135
      %v138 = vsel %vm133, %v136, 0.0
      %v139 = vadd.f32 %v129, %v138
      %140 = vset.pattern.permute.xlu0 7
      %141 = vperm.xlu0 %140, %v65
      %v142 = vpop.permute.xlu0 %141
      %vm143 = vcmp.eq.s32.totalorder %v68, %v142
      %144 = vset.pattern.permute.xlu0 7
      %145 = vperm.xlu0 %144, %v66
      %v146 = vpop.permute.xlu0 %145
      %v148 = vsel %vm143, %v146, 0.0
      %v149 = vadd.f32 %v139, %v148
      %vm150 = vcmask 130048
      %151 = vst.msk [vmem:[#allocation2] sm:$0xff] %vm150, %v149
    $region33: #{tpu_custom_call.1} parent=1 // pred_fallthru
      _
    %v152 = vld [vmem:[#allocation2] sm:$0xff]
    %v153 = vld [vmem:[#allocation8] sm:$0xff]
    %v154 = vld [vmem:[#allocation8 + $0x8] sm:$0xff]
    %v155 = vld [vmem:[%s3] sm:$0x1]
    %v157 = vperm.slane %v155, 0
    %vm159 = vcmask 130048
    %v161 = vsel %vm159, %v152, 0
    %163 = vmatpush.msra.mxu0 0.0
    %164 = vmatpush.msra.mxu0 0.0
    %165 = vmatpush.msra.mxu0 0.0
    %166 = vmatpush.msra.mxu0 0.0
    %167 = vmatpush.msra.mxu0 0.0
    %168 = vmatpush.msra.mxu0 0.0
    %169 = vmatpush.msra.mxu0 0.0
    %170 = vmatpush.msra.mxu0 0.0
    %171 = vmatpush.msra.mxu0 0.0
    %172 = vmatpush.msra.mxu0 0.0
    %173 = vmatpush.msra.mxu0 0.0
    %174 = vmatpush.msra.mxu0 0.0
    %175 = vmatpush.msra.mxu0 0.0
    %176 = vmatpush.msra.mxu0 0.0
    %177 = vmatpush.msra.mxu0 %v154
    %178 = vmatpush.msra.mxu0 %v153
    %179 = vmatmul.f32.gmra.mxu0 %v161
    %v180 = vpop.f32.mrf.mxu0
    %v181 = vadd.f32 %v157, %v180
    %182 = vdwg.mxu0
    %183 = vst [vmem:[#allocation9] sm:$0xff] %v181
    // Predicated region
    $region34: #{tpu_custom_call.1} parent=1 // pred_check
      _
    $region35: #{tpu_custom_call.1} parent=1 // pred_check_branch
      %185 = sbr.rel (0) target = $region37
    $region36: #{tpu_custom_call.1} parent=1 // pred_region
      %187 = vsyncadd [#allocation5], 0
      %s189 = sshll.u32 [#allocation9], 4
      %s190 = int_to_ptr.vmem [resolvable:$true] %s189
      %s191 = sshll.u32 %s4, 4
      %s192 = int_to_ptr.hbm [resolvable:$true] %s191
      %194 = dma.vmem_to_hbm [thread:$0]  %s190, 128, %s192, [#allocation5]
    $region37: #{tpu_custom_call.1} parent=1 // pred_fallthru
      _
    // Predicated region
    $region38: #{tpu_custom_call.1} parent=1 // pred_check
      _
    $region39: #{tpu_custom_call.1} parent=1 // pred_check_branch
      %196 = sbr.rel (0) target = $region41
    $region40: #{tpu_custom_call.1} parent=1 // pred_region
      %198 = dma.done [#allocation5], 128
    $region41: #{tpu_custom_call.1} parent=1 // pred_fallthru
      _
    %199 = vsyncpa [#allocation4], 1
    %200 = vsyncpa [#allocation7], 1
    %201 = vsyncpa [#allocation5], 1

</llo_original>
